<compile_context>
chip_gen: v7x
topology: tpu7x:2x2x1
jax: 0.10.0
libtpu: 0.0.40
codegen_flags: <defaults>
</compile_context>

<pallas_src>
import functools

import jax
import jax.numpy as jnp
import numpy as np
from jax.experimental import pallas as pl
from jax.experimental.pallas import tpu as pltpu

EPS = 1e-8


# --------------------------------- kernel -----------------------------------
def cln_kernel(x_ref, g_ref, b_ref, invcnt_ref, o_ref, carry_ref,
               *, n_time, ragged, eps):
    """One (batch, time-tile) block per grid step.

    x_ref:      (1, C, Tt) input block (channels on sublanes, time on lanes)
    g_ref:      (C, 1)     gain
    b_ref:      (C, 1)     bias
    invcnt_ref: (1, Tt)    precomputed 1 / (C * (t + 1)) for this tile
    o_ref:      (1, C, Tt) output block
    carry_ref:  (2, 1)     VMEM scratch: running [cum_sum; cum_pow_sum]
    n_time:     true (unpadded) time length, for ragged-tile masking
    ragged:     static bool, True iff the last time tile overruns n_time
    """
    t_blk = pl.program_id(1)

    # New batch row -> reset the running totals.
    @pl.when(t_blk == 0)
    def _():
        carry_ref[...] = jnp.zeros_like(carry_ref)

    x = x_ref[0].astype(jnp.float32)                     # (C, Tt)
    Tt = x.shape[1]

    # ---- per-time-step channel sums of x and x^2 (single sweep over x) ----
    step_sum = jnp.sum(x, axis=0, keepdims=True)         # (1, Tt)
    step_pow = jnp.sum(x * x, axis=0, keepdims=True)     # (1, Tt)

    # Pack both stat rows into one (2, Tt) slab so a single scan covers both.
    row = jax.lax.broadcasted_iota(jnp.int32, (2, Tt), 0)
    s = jnp.where(row == 0,
                  jnp.broadcast_to(step_sum, (2, Tt)),
                  jnp.broadcast_to(step_pow, (2, Tt)))

    if ragged:
        # Last tile overruns T: zero out-of-range lanes so garbage never
        # enters the carry.  (Valid lanes are unaffected either way because
        # the scan only propagates forward.)
        lane1 = jax.lax.broadcasted_iota(jnp.int32, (1, Tt), 1)
        t_global = t_blk * Tt + lane1
        s = jnp.where(t_global < n_time, s, 0.0)

    carry = carry_ref[...]                               # (2, 1)
    tile_total = jnp.sum(s, axis=1, keepdims=True)       # (2, 1)

    # ---- Hillis-Steele inclusive prefix sum along the lane (time) axis ----
    # pltpu.roll follows jnp.roll semantics: rolled[:, i] = s[:, i - shift].
    lane = jax.lax.broadcasted_iota(jnp.int32, (2, Tt), 1)
    shift = 1
    while shift < Tt:                                    # ceil(log2(Tt)) steps
        rolled = pltpu.roll(s, shift=shift, axis=1)
        s = s + jnp.where(lane >= shift, rolled, 0.0)
        shift *= 2

    cum = s + carry                                      # (2, Tt)
    carry_ref[...] = carry + tile_total                  # carry to next tile

    cum_sum = cum[0:1, :]                                # (1, Tt)
    cum_pow = cum[1:2, :]                                # (1, Tt)
    inv_cnt = invcnt_ref[...]                            # (1, Tt)

    cum_mean = cum_sum * inv_cnt
    cum_var = (cum_pow - 2.0 * cum_mean * cum_sum) * inv_cnt + cum_mean * cum_mean
    inv_std = jax.lax.rsqrt(cum_var + eps)               # (1, Tt)

    # normalize + affine: (1,Tt) broadcasts over sublanes, (C,1) over lanes
    o_ref[0] = ((x - cum_mean) * inv_std * g_ref[...] + b_ref[...]).astype(o_ref.dtype)


# -------------------------------- wrapper ------------------------------------
def cln_forward(x, gain, bias, eps=EPS, *, max_time_tile=2048,
                vmem_budget_bytes=8 * 1024 * 1024):
    """x: (B, C, T); gain/bias: (1, C, 1).  Returns (B, C, T)."""
    x = jnp.asarray(x)
    B, C, T = x.shape
    orig_T = T

    # Only tiny inputs (T < 128) get padded; realistic sizes stream unpadded.
    if T < 128:
        x = jnp.pad(x, ((0, 0), (0, 0), (0, 128 - T)))
        T = 128

    # Time-tile choice: multiple of 128, <= T, sized so the ~4 pipelined
    # (C, Tt) f32 buffers stay within the VMEM budget on all chips.
    Cp = -(-C // 8) * 8
    lanes = max(128, vmem_budget_bytes // (4 * 4 * Cp))
    tile = max(128, (min(max_time_tile, lanes) // 128) * 128)
    Tt = min(tile, (T // 128) * 128)
    nT = pl.cdiv(T, Tt)
    ragged = (T % Tt) != 0

    g = gain.reshape(C, 1).astype(jnp.float32)
    b = bias.reshape(C, 1).astype(jnp.float32)
    inv_cnt = (1.0 / (jnp.arange(1, T + 1, dtype=jnp.float32) * C)).reshape(1, T)

    kernel = functools.partial(cln_kernel, n_time=T, ragged=ragged, eps=eps)
    out = pl.pallas_call(
        kernel,
        grid=(B, nT),
        in_specs=[
            pl.BlockSpec((1, C, Tt), lambda i, t: (i, 0, t)),
            pl.BlockSpec((C, 1), lambda i, t: (0, 0)),
            pl.BlockSpec((C, 1), lambda i, t: (0, 0)),
            pl.BlockSpec((1, Tt), lambda i, t: (0, t)),
        ],
        out_specs=pl.BlockSpec((1, C, Tt), lambda i, t: (i, 0, t)),
        out_shape=jax.ShapeDtypeStruct((B, C, T), x.dtype),
        scratch_shapes=[pltpu.VMEM((2, 1), jnp.float32)],
        compiler_params=pltpu.CompilerParams(
            dimension_semantics=("parallel", "arbitrary"),
            vmem_limit_bytes=32 * 1024 * 1024),
    )(x, g, b, inv_cnt)

    if orig_T != T:
        out = out[:, :, :orig_T]
    return out


# --------------------------- pure-JAX reference ------------------------------
def cln_reference(x, gain, bias, eps=EPS):
    B, C, T = x.shape
    step_sum = jnp.sum(x, axis=1)                    # (B, T)
    step_pow_sum = jnp.sum(x * x, axis=1)            # (B, T)
    cum_sum = jnp.cumsum(step_sum, axis=1)
    cum_pow_sum = jnp.cumsum(step_pow_sum, axis=1)
    entry_cnt = jnp.arange(C, C * (T + 1), C, dtype=jnp.float32)[None, :]
    cum_mean = cum_sum / entry_cnt
    cum_var = (cum_pow_sum - 2.0 * cum_mean * cum_sum) / entry_cnt + cum_mean ** 2
    cum_std = jnp.sqrt(cum_var + eps)
    xhat = (x - cum_mean[:, None, :]) / cum_std[:, None, :]
    return xhat * gain + bias


# ----------------------------------- main ------------------------------------
if __name__ == "__main__":
    key = jax.random.PRNGKey(0)
    k1, k2, k3, k4, k5 = jax.random.split(key, 5)

    # Case 1: multi-tile with a ragged last time tile (T=192, Tt=128) + carry.
    B, C, T = 2, 8, 192
    x = jax.random.normal(k1, (B, C, T), jnp.float32)
    gain = (1.0 + 0.1 * jax.random.normal(k2, (1, C, 1))).astype(jnp.float32)
    bias = (0.1 * jax.random.normal(k3, (1, C, 1))).astype(jnp.float32)
    y = jax.block_until_ready(cln_forward(x, gain, bias))
    assert y.shape == (B, C, T)
    np.testing.assert_allclose(np.asarray(y), np.asarray(cln_reference(x, gain, bias)),
                               rtol=1e-4, atol=1e-4)

    # Case 2: tiny T (< 128) and unaligned channel count -> pad path.
    B2, C2, T2 = 1, 5, 50
    x2 = jax.random.normal(k4, (B2, C2, T2), jnp.float32)
    g2 = jnp.ones((1, C2, 1), jnp.float32)
    b2 = jnp.zeros((1, C2, 1), jnp.float32)
    y2 = jax.block_until_ready(cln_forward(x2, g2, b2))
    np.testing.assert_allclose(np.asarray(y2), np.asarray(cln_reference(x2, g2, b2)),
                               rtol=1e-4, atol=1e-4)

    # Case 3: forced small tile -> two exact time tiles, exercises the carry.
    B3, C3, T3 = 2, 16, 256
    x3 = jax.random.normal(k5, (B3, C3, T3), jnp.float32)
    g3 = jnp.ones((1, C3, 1), jnp.float32)
    b3 = jnp.zeros((1, C3, 1), jnp.float32)
    y3 = jax.block_until_ready(cln_forward(x3, g3, b3, max_time_tile=128))
    np.testing.assert_allclose(np.asarray(y3), np.asarray(cln_reference(x3, g3, b3)),
                               rtol=1e-4, atol=1e-4)

    print("KERNEL_OK")
</pallas_src>

<mosaic_0001>
module attributes {stable_mosaic.version = 11 : i64} {
  func.func @cln_kernel(%arg0: i32, %arg1: i32, %arg2: memref<1x8x128xf32, #tpu.memory_space<vmem>>, %arg3: memref<8x1xf32, #tpu.memory_space<vmem>>, %arg4: memref<8x1xf32, #tpu.memory_space<vmem>>, %arg5: memref<1x128xf32, #tpu.memory_space<vmem>>, %arg6: memref<1x8x128xf32, #tpu.memory_space<vmem>>, %arg7: memref<2x1xf32, #tpu.memory_space<vmem>>) attributes {dimension_semantics = [#tpu.dimension_semantics<parallel>, #tpu.dimension_semantics<arbitrary>], iteration_bounds = array<i64: 2, 2>, scalar_prefetch = 0 : i64, scratch_operands = 1 : i64, tpu.core_type = #tpu.core_type<tc>, window_params = [{transform_indices = @transform_0, window_bounds = array<i64: 1, 8, 128>}, {pipeline_mode = #tpu.pipeline_mode<synchronous>, transform_indices = @transform_1, window_bounds = array<i64: 8, 1>}, {pipeline_mode = #tpu.pipeline_mode<synchronous>, transform_indices = @transform_2, window_bounds = array<i64: 8, 1>}, {transform_indices = @transform_3, window_bounds = array<i64: 1, 128>}, {transform_indices = @transform_4, window_bounds = array<i64: 1, 8, 128>}]} {
    %c0_i32 = arith.constant 0 : i32
    %0 = arith.cmpi eq, %arg1, %c0_i32 : i32
    %1 = arith.extui %0 : i1 to i32
    %c0_i32_0 = arith.constant 0 : i32
    %2 = arith.cmpi ne, %1, %c0_i32_0 : i32
    scf.if %2 {
      %cst_36 = arith.constant 0.000000e+00 : f32
      %105 = vector.broadcast %cst_36 : f32 to vector<2x1xf32>
      %c0_37 = arith.constant 0 : index
      %c0_38 = arith.constant 0 : index
      %106 = vector.load %arg7[%c0_37, %c0_38] : memref<2x1xf32, #tpu.memory_space<vmem>>, vector<2x1xf32>
      tpu.vector_store %arg7[%c0_37, %c0_38], %105 {strides = array<i32>} : memref<2x1xf32, #tpu.memory_space<vmem>>, vector<2x1xf32>,
    } else {
    }
    %c0 = arith.constant 0 : index
    %c0_1 = arith.constant 0 : index
    %c0_2 = arith.constant 0 : index
    %3 = vector.load %arg2[%c0, %c0_1, %c0_2] : memref<1x8x128xf32, #tpu.memory_space<vmem>>, vector<1x8x128xf32>
    %4 = vector.shape_cast %3 : vector<1x8x128xf32> to vector<8x128xf32>
    %cst = arith.constant dense<0.000000e+00> : vector<128xf32>
    %5 = vector.multi_reduction <add>, %4, %cst [0] : vector<8x128xf32> to vector<128xf32>
    %6 = vector.shape_cast %5 : vector<128xf32> to vector<1x128xf32>
    %7 = arith.mulf %4, %4 : vector<8x128xf32>
    %cst_3 = arith.constant dense<0.000000e+00> : vector<128xf32>
    %8 = vector.multi_reduction <add>, %7, %cst_3 [0] : vector<8x128xf32> to vector<128xf32>
    %9 = vector.shape_cast %8 : vector<128xf32> to vector<1x128xf32>
    %10 = tpu.iota {dimensions = array<i32: 0>} : vector<2x128xi32>
    %c0_i32_4 = arith.constant 0 : i32
    %11 = vector.broadcast %c0_i32_4 : i32 to vector<2x128xi32>
    %12 = arith.cmpi eq, %10, %11 : vector<2x128xi32>
    %13 = vector.shape_cast %6 : vector<1x128xf32> to vector<1x128xf32>
    %14 = vector.broadcast %13 : vector<1x128xf32> to vector<2x128xf32>
    %15 = vector.shape_cast %9 : vector<1x128xf32> to vector<1x128xf32>
    %16 = vector.broadcast %15 : vector<1x128xf32> to vector<2x128xf32>
    %17 = arith.select %12, %14, %16 : vector<2x128xi1>, vector<2x128xf32>
    %18 = tpu.iota {dimensions = array<i32: 1>} : vector<1x128xi32>
    %c128_i32 = arith.constant 128 : i32
    %19 = arith.muli %arg1, %c128_i32 : i32
    %20 = vector.broadcast %19 : i32 to vector<1x128xi32>
    %21 = arith.addi %20, %18 : vector<1x128xi32>
    %c192_i32 = arith.constant 192 : i32
    %22 = vector.broadcast %c192_i32 : i32 to vector<1x128xi32>
    %23 = arith.cmpi slt, %21, %22 : vector<1x128xi32>
    %cst_5 = arith.constant 0.000000e+00 : f32
    %24 = vector.shape_cast %23 : vector<1x128xi1> to vector<1x128xi1>
    %25 = vector.broadcast %24 : vector<1x128xi1> to vector<2x128xi1>
    %26 = vector.broadcast %cst_5 : f32 to vector<2x128xf32>
    %27 = arith.select %25, %17, %26 : vector<2x128xi1>, vector<2x128xf32>
    %c0_6 = arith.constant 0 : index
    %c0_7 = arith.constant 0 : index
    %28 = vector.load %arg7[%c0_6, %c0_7] : memref<2x1xf32, #tpu.memory_space<vmem>>, vector<2x1xf32>
    %cst_8 = arith.constant dense<0.000000e+00> : vector<2xf32>
    %29 = vector.multi_reduction <add>, %27, %cst_8 [1] : vector<2x128xf32> to vector<2xf32>
    %30 = vector.shape_cast %29 : vector<2xf32> to vector<2x1xf32>
    %31 = tpu.iota {dimensions = array<i32: 1>} : vector<2x128xi32>
    %c1_i32 = arith.constant 1 : i32
    %32 = tpu.dynamic_rotate %27 by %c1_i32 dim 1 : vector<2x128xf32>, i32 -> vector<2x128xf32>
    %c1_i32_9 = arith.constant 1 : i32
    %33 = vector.broadcast %c1_i32_9 : i32 to vector<2x128xi32>
    %34 = arith.cmpi sge, %31, %33 : vector<2x128xi32>
    %cst_10 = arith.constant 0.000000e+00 : f32
    %35 = vector.broadcast %cst_10 : f32 to vector<2x128xf32>
    %36 = arith.select %34, %32, %35 : vector<2x128xi1>, vector<2x128xf32>
    %37 = arith.addf %27, %36 : vector<2x128xf32>
    %c2_i32 = arith.constant 2 : i32
    %38 = tpu.dynamic_rotate %37 by %c2_i32 dim 1 : vector<2x128xf32>, i32 -> vector<2x128xf32>
    %c2_i32_11 = arith.constant 2 : i32
    %39 = vector.broadcast %c2_i32_11 : i32 to vector<2x128xi32>
    %40 = arith.cmpi sge, %31, %39 : vector<2x128xi32>
    %cst_12 = arith.constant 0.000000e+00 : f32
    %41 = vector.broadcast %cst_12 : f32 to vector<2x128xf32>
    %42 = arith.select %40, %38, %41 : vector<2x128xi1>, vector<2x128xf32>
    %43 = arith.addf %37, %42 : vector<2x128xf32>
    %c4_i32 = arith.constant 4 : i32
    %44 = tpu.dynamic_rotate %43 by %c4_i32 dim 1 : vector<2x128xf32>, i32 -> vector<2x128xf32>
    %c4_i32_13 = arith.constant 4 : i32
    %45 = vector.broadcast %c4_i32_13 : i32 to vector<2x128xi32>
    %46 = arith.cmpi sge, %31, %45 : vector<2x128xi32>
    %cst_14 = arith.constant 0.000000e+00 : f32
    %47 = vector.broadcast %cst_14 : f32 to vector<2x128xf32>
    %48 = arith.select %46, %44, %47 : vector<2x128xi1>, vector<2x128xf32>
    %49 = arith.addf %43, %48 : vector<2x128xf32>
    %c8_i32 = arith.constant 8 : i32
    %50 = tpu.dynamic_rotate %49 by %c8_i32 dim 1 : vector<2x128xf32>, i32 -> vector<2x128xf32>
    %c8_i32_15 = arith.constant 8 : i32
    %51 = vector.broadcast %c8_i32_15 : i32 to vector<2x128xi32>
    %52 = arith.cmpi sge, %31, %51 : vector<2x128xi32>
    %cst_16 = arith.constant 0.000000e+00 : f32
    %53 = vector.broadcast %cst_16 : f32 to vector<2x128xf32>
    %54 = arith.select %52, %50, %53 : vector<2x128xi1>, vector<2x128xf32>
    %55 = arith.addf %49, %54 : vector<2x128xf32>
    %c16_i32 = arith.constant 16 : i32
    %56 = tpu.dynamic_rotate %55 by %c16_i32 dim 1 : vector<2x128xf32>, i32 -> vector<2x128xf32>
    %c16_i32_17 = arith.constant 16 : i32
    %57 = vector.broadcast %c16_i32_17 : i32 to vector<2x128xi32>
    %58 = arith.cmpi sge, %31, %57 : vector<2x128xi32>
    %cst_18 = arith.constant 0.000000e+00 : f32
    %59 = vector.broadcast %cst_18 : f32 to vector<2x128xf32>
    %60 = arith.select %58, %56, %59 : vector<2x128xi1>, vector<2x128xf32>
    %61 = arith.addf %55, %60 : vector<2x128xf32>
    %c32_i32 = arith.constant 32 : i32
    %62 = tpu.dynamic_rotate %61 by %c32_i32 dim 1 : vector<2x128xf32>, i32 -> vector<2x128xf32>
    %c32_i32_19 = arith.constant 32 : i32
    %63 = vector.broadcast %c32_i32_19 : i32 to vector<2x128xi32>
    %64 = arith.cmpi sge, %31, %63 : vector<2x128xi32>
    %cst_20 = arith.constant 0.000000e+00 : f32
    %65 = vector.broadcast %cst_20 : f32 to vector<2x128xf32>
    %66 = arith.select %64, %62, %65 : vector<2x128xi1>, vector<2x128xf32>
    %67 = arith.addf %61, %66 : vector<2x128xf32>
    %c64_i32 = arith.constant 64 : i32
    %68 = tpu.dynamic_rotate %67 by %c64_i32 dim 1 : vector<2x128xf32>, i32 -> vector<2x128xf32>
    %c64_i32_21 = arith.constant 64 : i32
    %69 = vector.broadcast %c64_i32_21 : i32 to vector<2x128xi32>
    %70 = arith.cmpi sge, %31, %69 : vector<2x128xi32>
    %cst_22 = arith.constant 0.000000e+00 : f32
    %71 = vector.broadcast %cst_22 : f32 to vector<2x128xf32>
    %72 = arith.select %70, %68, %71 : vector<2x128xi1>, vector<2x128xf32>
    %73 = arith.addf %67, %72 : vector<2x128xf32>
    %74 = vector.broadcast %28 : vector<2x1xf32> to vector<2x128xf32>
    %75 = arith.addf %73, %74 : vector<2x128xf32>
    %76 = arith.addf %28, %30 : vector<2x1xf32>
    %c0_23 = arith.constant 0 : index
    %c0_24 = arith.constant 0 : index
    %77 = vector.load %arg7[%c0_23, %c0_24] : memref<2x1xf32, #tpu.memory_space<vmem>>, vector<2x1xf32>
    tpu.vector_store %arg7[%c0_23, %c0_24], %76 {strides = array<i32>} : memref<2x1xf32, #tpu.memory_space<vmem>>, vector<2x1xf32>,
    %78 = vector.extract_strided_slice %75 {offsets = [0, 0], sizes = [1, 128], strides = [1, 1]} : vector<2x128xf32> to vector<1x128xf32>
    %79 = vector.extract_strided_slice %75 {offsets = [1, 0], sizes = [1, 128], strides = [1, 1]} : vector<2x128xf32> to vector<1x128xf32>
    %c0_25 = arith.constant 0 : index
    %c0_26 = arith.constant 0 : index
    %80 = vector.load %arg5[%c0_25, %c0_26] : memref<1x128xf32, #tpu.memory_space<vmem>>, vector<1x128xf32>
    %81 = arith.mulf %78, %80 : vector<1x128xf32>
    %cst_27 = arith.constant 2.000000e+00 : f32
    %82 = vector.broadcast %cst_27 : f32 to vector<1x128xf32>
    %83 = arith.mulf %82, %81 : vector<1x128xf32>
    %84 = arith.mulf %83, %78 : vector<1x128xf32>
    %85 = arith.subf %79, %84 : vector<1x128xf32>
    %86 = arith.mulf %85, %80 : vector<1x128xf32>
    %87 = arith.mulf %81, %81 : vector<1x128xf32>
    %88 = arith.addf %86, %87 : vector<1x128xf32>
    %cst_28 = arith.constant 9.99999993E-9 : f32
    %89 = vector.broadcast %cst_28 : f32 to vector<1x128xf32>
    %90 = arith.addf %88, %89 : vector<1x128xf32>
    %91 = math.rsqrt %90 : vector<1x128xf32>
    %92 = vector.broadcast %81 : vector<1x128xf32> to vector<8x128xf32>
    %93 = arith.subf %4, %92 : vector<8x128xf32>
    %94 = vector.broadcast %91 : vector<1x128xf32> to vector<8x128xf32>
    %95 = arith.mulf %93, %94 : vector<8x128xf32>
    %c0_29 = arith.constant 0 : index
    %c0_30 = arith.constant 0 : index
    %96 = vector.load %arg3[%c0_29, %c0_30] : memref<8x1xf32, #tpu.memory_space<vmem>>, vector<8x1xf32>
    %97 = vector.broadcast %96 : vector<8x1xf32> to vector<8x128xf32>
    %98 = arith.mulf %95, %97 : vector<8x128xf32>
    %c0_31 = arith.constant 0 : index
    %c0_32 = arith.constant 0 : index
    %99 = vector.load %arg4[%c0_31, %c0_32] : memref<8x1xf32, #tpu.memory_space<vmem>>, vector<8x1xf32>
    %100 = vector.broadcast %99 : vector<8x1xf32> to vector<8x128xf32>
    %101 = arith.addf %98, %100 : vector<8x128xf32>
    %c0_33 = arith.constant 0 : index
    %c0_34 = arith.constant 0 : index
    %c0_35 = arith.constant 0 : index
    %102 = vector.load %arg6[%c0_33, %c0_34, %c0_35] : memref<1x8x128xf32, #tpu.memory_space<vmem>>, vector<1x8x128xf32>
    %103 = vector.shape_cast %102 : vector<1x8x128xf32> to vector<8x128xf32>
    %104 = vector.shape_cast %101 : vector<8x128xf32> to vector<1x8x128xf32>
    tpu.vector_store %arg6[%c0_33, %c0_34, %c0_35], %104 {strides = array<i32>} : memref<1x8x128xf32, #tpu.memory_space<vmem>>, vector<1x8x128xf32>,
    return
  }
  func.func @transform_0(%arg0: i32, %arg1: i32) -> (i32, i32, i32) {
    %c0_i32 = arith.constant 0 : i32
    %c0_i32_0 = arith.constant 0 : i32
    return %arg0, %c0_i32, %arg1 : i32, i32, i32
  }
  func.func @transform_1(%arg0: i32, %arg1: i32) -> (i32, i32) {
    %c0_i32 = arith.constant 0 : i32
    %c0_i32_0 = arith.constant 0 : i32
    %c0_i32_1 = arith.constant 0 : i32
    return %c0_i32, %c0_i32_0 : i32, i32
  }
  func.func @transform_2(%arg0: i32, %arg1: i32) -> (i32, i32) {
    %c0_i32 = arith.constant 0 : i32
    %c0_i32_0 = arith.constant 0 : i32
    %c0_i32_1 = arith.constant 0 : i32
    return %c0_i32, %c0_i32_0 : i32, i32
  }
  func.func @transform_3(%arg0: i32, %arg1: i32) -> (i32, i32) {
    %c0_i32 = arith.constant 0 : i32
    %c0_i32_0 = arith.constant 0 : i32
    return %c0_i32, %arg1 : i32, i32
  }
  func.func @transform_4(%arg0: i32, %arg1: i32) -> (i32, i32, i32) {
    %c0_i32 = arith.constant 0 : i32
    %c0_i32_0 = arith.constant 0 : i32
    return %arg0, %c0_i32, %arg1 : i32, i32, i32
  }
}

</mosaic_0001>

<llo_original>
// kernel: tpu_custom_call.1
$region0: #{tpu_custom_call.1}
  #allocation0 [shape = 'u32[]', space=smem, size = 0x4, offset = 0x4, fixed_abs, tag = 'smem constant byte address 0x4 - core index']
  #allocation1 [shape = 'u32[144,128]{1,0:T(1,128)}', space=vmem, size = 0x12000, scoped, tag = 'internal scratch']
  #allocation2 [shape = 'f32[2,1]{1,0:T(2,128)}', space=vmem, size = 0x400, scoped, tag = 'scratch operand']
  %s0 = inlined_call_operand.hbm [shape: f32[2,8,192], index: 0, kind: input, shape index: {}]
  %s1 = inlined_call_operand.vmem [shape: f32[8,1], index: 1, kind: input, shape index: {}]
  %s2 = inlined_call_operand.vmem [shape: f32[8,1], index: 2, kind: input, shape index: {}]
  %s3 = inlined_call_operand.vmem [shape: f32[1,192], index: 3, kind: input, shape index: {}]
  %s4 = inlined_call_operand.hbm [shape: f32[2,8,192], index: 4, kind: output, shape index: {}]
  %s5 = sld [smem:[#allocation0]]
  $region57: #{tpu_custom_call.1} parent=0
    _
  %s7 = ssub.s32 1, %s5
  %s8 = scalar_select 0, %s7, %s5
  $region1: #{tpu_custom_call.1} parent=0
    #allocation3 [shape = 'u8[8192]{0}', space=vmem, size = 0x2000, scoped, tag = 'input window, operand 0']
    #allocation4 [shape = 's32[2]{0}', space=sflag, size = 0x8, scoped, tag = 'scoped memory for tpu_custom_call.1']
    #allocation5 [shape = 's32[2]{0}', space=sflag, size = 0x8, scoped, tag = 'scoped memory for tpu_custom_call.1']
    #allocation6 [shape = 'u8[8192]{0}', space=vmem, size = 0x2000, scoped, tag = 'output window, operand 0']
    %9 = vsyncpa [#allocation4], 0
    %s10 = scalar_lea.sflag [#allocation4], 1
    %11 = vsyncpa %s10, 0
    %12 = vsyncpa [#allocation5], 0
    %s13 = scalar_lea.sflag [#allocation5], 1
    %14 = vsyncpa %s13, 0
    loop: start=0, step=1, limit=6
    $region2: #{tpu_custom_call.1} parent=1 // loop_pre_header
      _
    $region3: #{tpu_custom_call.1} parent=1 // loop_header
      %s16 = sphi 0, %s20
      %p17 = scmp.ge.s32.totalorder %s16, 6
      %s23 = sphi 0, %s35
      %s24 = sphi 0, %s31
      %s25 = sphi 0, %s23
      %s26 = sphi 0, %s24
      %s27 = sphi 0, %s25
      %s28 = sphi 0, %s26
      %s40 = sphi 0, %s42
      %s43 = sphi 0, %s40
      %s44 = sphi 0, %s43
      %s60 = sphi 0, %s44
      %s64 = sphi 0, %s64
      %s66 = sphi 0, %s64
      %s67 = sphi 0, %s66
      %s81 = sphi 0, %s67
      %s85 = sphi 0, %s85
      %s87 = sphi 0, %s85
      %s88 = sphi 0, %s87
      %s102 = sphi 0, %s88
      %s108 = sphi 0, %s110
      %s111 = sphi 0, %s108
      %s112 = sphi 0, %s111
      %s128 = sphi 0, %s112
      %s136 = sphi 0, %s138
      %s139 = sphi 0, %s136
      %s140 = sphi 0, %s139
      %s156 = sphi 0, %s140
    $region4: #{tpu_custom_call.1} parent=1 // loop_header_branch
      %19 = sbr.rel (%p17) target = $region8
    $region5: #{tpu_custom_call.1} parent=1 // loop_body
      %s21 = ssub.s32 %s16, 1
      %s22 = ssub.s32 %s16, 2
      %s29 = sadd.s32 1, %s24
      %p30 = scmp.ge.s32.totalorder %s29, 2
      %s31 = scalar_select %p30, 0, %s29
      %s32 = sadd.s32 1, %s23
      %s33 = scalar_select %p30, %s32, %s23
      %p34 = scmp.ge.s32.totalorder %s33, 2
      %s35 = scalar_select %p34, 0, %s33
      %s36 = ssub.s32 %s23, %s35
      %s37 = ssub.s32 %s24, %s31
      %s38 = sor.u32 %s36, %s37
      %p39 = scmp.eq.s32.totalorder %s38, 0
      %s41 = sadd.s32 %s40, 1
      %s42 = scalar_select %p39, %s40, %s41
      %p45 = pneg %p39
      %p46 = scmp.eq.s32.totalorder %s16, 3
      %p47 = por %p45, %p46
      %p48 = scmp.ne.s32.totalorder %s40, %s43
      %p49 = scmp.eq.s32.totalorder %s16, 0
      %p50 = por %p48, %p49
      %p51 = scmp.ne.s32.totalorder %s40, %s43
      %p52 = scmp.eq.s32.totalorder %s21, 3
      %p53 = por %p51, %p52
      %p54 = scmp.ne.s32.totalorder %s43, %s44
      %p55 = scmp.eq.s32.totalorder %s21, 0
      %p56 = por %p54, %p55
      %p57 = scmp.ne.s32.totalorder %s43, %s44
      %p58 = scmp.eq.s32.totalorder %s22, 3
      %p59 = por %p57, %p58
      %p61 = scmp.ne.s32.totalorder %s44, %s60
      %p62 = scmp.eq.s32.totalorder %s22, 0
      %p63 = por %p61, %p62
      %s65 = sadd.s32 %s64, 1
      %p68 = scmp.eq.s32.totalorder %s16, 3
      %p69 = scmp.ne.s32.totalorder %s64, %s66
      %p70 = scmp.eq.s32.totalorder %s16, 0
      %p71 = por %p69, %p70
      %p72 = scmp.ne.s32.totalorder %s64, %s66
      %p73 = scmp.eq.s32.totalorder %s21, 3
      %p74 = por %p72, %p73
      %p75 = scmp.ne.s32.totalorder %s66, %s67
      %p76 = scmp.eq.s32.totalorder %s21, 0
      %p77 = por %p75, %p76
      %p78 = scmp.ne.s32.totalorder %s66, %s67
      %p79 = scmp.eq.s32.totalorder %s22, 3
      %p80 = por %p78, %p79
      %p82 = scmp.ne.s32.totalorder %s67, %s81
      %p83 = scmp.eq.s32.totalorder %s22, 0
      %p84 = por %p82, %p83
      %s86 = sadd.s32 %s85, 1
      %p89 = scmp.eq.s32.totalorder %s16, 3
      %p90 = scmp.ne.s32.totalorder %s85, %s87
      %p91 = scmp.eq.s32.totalorder %s16, 0
      %p92 = por %p90, %p91
      %p93 = scmp.ne.s32.totalorder %s85, %s87
      %p94 = scmp.eq.s32.totalorder %s21, 3
      %p95 = por %p93, %p94
      %p96 = scmp.ne.s32.totalorder %s87, %s88
      %p97 = scmp.eq.s32.totalorder %s21, 0
      %p98 = por %p96, %p97
      %p99 = scmp.ne.s32.totalorder %s87, %s88
      %p100 = scmp.eq.s32.totalorder %s22, 3
      %p101 = por %p99, %p100
      %p103 = scmp.ne.s32.totalorder %s88, %s102
      %p104 = scmp.eq.s32.totalorder %s22, 0
      %p105 = por %p103, %p104
      %s106 = ssub.s32 %s24, %s31
      %p107 = scmp.eq.s32.totalorder %s106, 0
      %s109 = sadd.s32 %s108, 1
      %s110 = scalar_select %p107, %s108, %s109
      %p113 = pneg %p107
      %p114 = scmp.eq.s32.totalorder %s16, 3
      %p115 = por %p113, %p114
      %p116 = scmp.ne.s32.totalorder %s108, %s111
      %p117 = scmp.eq.s32.totalorder %s16, 0
      %p118 = por %p116, %p117
      %p119 = scmp.ne.s32.totalorder %s108, %s111
      %p120 = scmp.eq.s32.totalorder %s21, 3
      %p121 = por %p119, %p120
      %p122 = scmp.ne.s32.totalorder %s111, %s112
      %p123 = scmp.eq.s32.totalorder %s21, 0
      %p124 = por %p122, %p123
      %p125 = scmp.ne.s32.totalorder %s111, %s112
      %p126 = scmp.eq.s32.totalorder %s22, 3
      %p127 = por %p125, %p126
      %p129 = scmp.ne.s32.totalorder %s112, %s128
      %p130 = scmp.eq.s32.totalorder %s22, 0
      %p131 = por %p129, %p130
      %s132 = ssub.s32 %s23, %s35
      %s133 = ssub.s32 %s24, %s31
      %s134 = sor.u32 %s132, %s133
      %p135 = scmp.eq.s32.totalorder %s134, 0
      %s137 = sadd.s32 %s136, 1
      %s138 = scalar_select %p135, %s136, %s137
      %p141 = pneg %p135
      %p142 = scmp.eq.s32.totalorder %s16, 3
      %p143 = por %p141, %p142
      %p144 = scmp.ne.s32.totalorder %s136, %s139
      %p145 = scmp.eq.s32.totalorder %s16, 0
      %p146 = por %p144, %p145
      %p147 = scmp.ne.s32.totalorder %s136, %s139
      %p148 = scmp.eq.s32.totalorder %s21, 3
      %p149 = por %p147, %p148
      %p150 = scmp.ne.s32.totalorder %s139, %s140
      %p151 = scmp.eq.s32.totalorder %s21, 0
      %p152 = por %p150, %p151
      %p153 = scmp.ne.s32.totalorder %s139, %s140
      %p154 = scmp.eq.s32.totalorder %s22, 3
      %p155 = por %p153, %p154
      %p157 = scmp.ne.s32.totalorder %s140, %s156
      %p158 = scmp.eq.s32.totalorder %s22, 0
      %p159 = por %p157, %p158
      %p160 = scmp.le.s32.totalorder 1, %s16
      %p161 = scmp.lt.s32.totalorder %s16, 5
      %p162 = pnand %p160, %p161
      %p163 = pneg %p162
      // Predicated region
      $region9: #{tpu_custom_call.1} parent=5 // pred_check
        _
      $region10: #{tpu_custom_call.1} parent=5 // pred_check_branch
        %165 = sbr.rel (%p162) target = $region12
      $region11: #{tpu_custom_call.1} parent=5 // pred_region
        %s166 = ssub.s32 %s16, 1
        // Predicated region
        $region13: #{tpu_custom_call.1} parent=11 // pred_check
          %p167 = pneg %p77
        $region14: #{tpu_custom_call.1} parent=11 // pred_check_branch
          %169 = sbr.rel (%p167) target = $region16
        $region15: #{tpu_custom_call.1} parent=11 // pred_region
          _
        $region16: #{tpu_custom_call.1} parent=11 // pred_fallthru
          _
        // Predicated region
        $region17: #{tpu_custom_call.1} parent=11 // pred_check
          %p170 = pneg %p98
        $region18: #{tpu_custom_call.1} parent=11 // pred_check_branch
          %172 = sbr.rel (%p170) target = $region20
        $region19: #{tpu_custom_call.1} parent=11 // pred_region
          _
        $region20: #{tpu_custom_call.1} parent=11 // pred_fallthru
          _
      $region12: #{tpu_custom_call.1} parent=5 // pred_fallthru
        _
      %p173 = scmp.lt.s32.totalorder %s16, 4
      // Predicated region
      $region21: #{tpu_custom_call.1} parent=5 // pred_check
        %p174 = pneg %p173
      $region22: #{tpu_custom_call.1} parent=5 // pred_check_branch
        %176 = sbr.rel (%p174) target = $region24
      $region23: #{tpu_custom_call.1} parent=5 // pred_region
        // Predicated region
        $region25: #{tpu_custom_call.1} parent=23 // pred_check
          %p177 = pneg %p50
        $region26: #{tpu_custom_call.1} parent=23 // pred_check_branch
          %179 = sbr.rel (%p177) target = $region28
        $region27: #{tpu_custom_call.1} parent=23 // pred_region
          %s180 = sand.u32 %s40, 1
          %s181 = scalar_lea.sflag [#allocation4], %s180
          %s182 = sand.u32 %s40, 1
          %s183 = smul.addr %s182, 8
          %s184 = scalar_lea.vmem [#allocation3], %s183
          %s186 = ssub.s32 128, 128
          %187 = vsyncadd %s181, %s186
          %s188 = smul.addr %s23, 2
          %s189 = sadd.s32 %s24, %s188
          %s190 = smul.addr %s189, 128
          %s191 = scalar_lea.hbm %s0, %s190
          %s193 = sshll.u32 %s184, 4
          %s194 = int_to_ptr.vmem [resolvable:$true] %s193
          %196 = dma.hbm_to_vmem [thread:$0]  %s191, 128, %s194, %s181
        $region28: #{tpu_custom_call.1} parent=23 // pred_fallthru
          _
        // Predicated region
        $region29: #{tpu_custom_call.1} parent=23 // pred_check
          %p197 = pneg %p118
        $region30: #{tpu_custom_call.1} parent=23 // pred_check_branch
          %199 = sbr.rel (%p197) target = $region32
        $region31: #{tpu_custom_call.1} parent=23 // pred_region
          %p200 = scmp.lt.s32.totalorder %s24, 1
          %s201 = scalar_select %p200, %s24, 1
          %s202 = scalar_lea.vmem %s3, %s201
        $region32: #{tpu_custom_call.1} parent=23 // pred_fallthru
          _
      $region24: #{tpu_custom_call.1} parent=5 // pred_fallthru
        _
      %p203 = scmp.le.s32.totalorder 1, %s16
      %p204 = scmp.lt.s32.totalorder %s16, 5
      %p205 = pnand %p203, %p204
      %p206 = pneg %p205
      // Predicated region
      $region33: #{tpu_custom_call.1} parent=5 // pred_check
        _
      $region34: #{tpu_custom_call.1} parent=5 // pred_check_branch
        %208 = sbr.rel (%p205) target = $region36
      $region35: #{tpu_custom_call.1} parent=5 // pred_region
        %s209 = ssub.s32 %s16, 1
        %s210 = sand.u32 %s43, 1
        %s211 = scalar_lea.sflag [#allocation4], %s210
        %s212 = sand.u32 %s43, 1
        %s213 = smul.addr %s212, 8
        %s214 = scalar_lea.vmem [#allocation3], %s213
        // Predicated region
        $region37: #{tpu_custom_call.1} parent=35 // pred_check
          %p215 = pneg %p56
        $region38: #{tpu_custom_call.1} parent=35 // pred_check_branch
          %217 = sbr.rel (%p215) target = $region40
        $region39: #{tpu_custom_call.1} parent=35 // pred_region
          %218 = dma.done %s211, 128
        $region40: #{tpu_custom_call.1} parent=35 // pred_fallthru
          _
        %s219 = sand.u32 %s43, 1
        %s220 = scalar_lea.sflag [#allocation4], %s219
        %s221 = sand.u32 %s43, 1
        %s222 = smul.addr %s221, 8
        %s223 = scalar_lea.vmem [#allocation3], %s222
        %p224 = pneg %p56
        %p225 = pneg %p53
        %p226 = pneg %p77
        %p227 = pneg %p74
        %p228 = pneg %p98
        %p229 = pneg %p95
        %p230 = scmp.lt.s32.totalorder %s26, 1
        %s231 = scalar_select %p230, %s26, 1
        %s232 = scalar_lea.vmem %s3, %s231
        %p233 = pneg %p124
        %p234 = pneg %p121
        %p235 = pneg %p152
        %p236 = pneg %p149
        %s237 = sand.u32 %s139, 1
        %s238 = scalar_lea.sflag [#allocation5], %s237
        %s239 = sand.u32 %s139, 1
        %s240 = smul.addr %s239, 8
        %s241 = scalar_lea.vmem [#allocation6], %s240
        %p242 = scmp.lt.s32.totalorder %s26, 1
        %s243 = scalar_select %p242, %s26, 1
        %s244 = scalar_lea.vmem %s3, %s243
        %p245 = scmp.eq.s32.totalorder %s26, 0
        // Predicated region
        $region41: #{tpu_custom_call.1} parent=35 // pred_check
          %p246 = pneg %p245
        $region42: #{tpu_custom_call.1} parent=35 // pred_check_branch
          %248 = sbr.rel (%p246) target = $region44
        $region43: #{tpu_custom_call.1} parent=35 // pred_region
          %vm249 = vcmask 1024
          %250 = vst.msk [vmem:[#allocation2] sm:$0x3] %vm249, 0.0
        $region44: #{tpu_custom_call.1} parent=35 // pred_fallthru
          _
        %v251 = vld [vmem:[%s214] sm:$0xff]
        %v252 = vrot.slane %v251, 4
        %v253 = vadd.f32 %v251, %v252
        %v254 = vrot.slane %v253, 2
        %v255 = vadd.f32 %v253, %v254
        %v256 = vrot.slane %v255, 1
        %v257 = vadd.f32 %v255, %v256
        %v258 = vmul.f32 %v251, %v251
        %v259 = vrot.slane %v258, 4
        %v260 = vadd.f32 %v258, %v259
        %v261 = vrot.slane %v260, 2
        %v262 = vadd.f32 %v260, %v261
        %v263 = vrot.slane %v262, 1
        %v264 = vadd.f32 %v262, %v263
        %v265 = vlaneseq
        %v266 = vshrl.u32 %v265, 7
        %vm267 = vcmp.eq.s32.totalorder %v266, 0
        %v268 = vsel %vm267, %v257, %v264
        %v269 = vlaneseq
        %v270 = vand.u32 %v269, 127
        %s271 = smul.u32 %s26, 128
        %v272 = vstv %s271
        %v273 = vadd.s32 %v272, %v270
        %vm274 = vcmp.lt.s32.totalorder %v273, 192
        %v275 = vsel %vm274, 1, 0
        %vm276 = vcmp.eq.s32.totalorder %v275, 1
        %v277 = vsel %vm276, %v268, 0.0
        %v278 = vld [vmem:[#allocation2] sm:$0x3]
        %vm279 = vcmask 1041408
        %v280 = vsel %vm279, %v277, 0.0
        %281 = vadd.xlane.f32.xlu0 %v280
        %v282 = vpop.xlane.xlu0 %281
        %283 = vrot.lane.b32.xlu0 %v277, 1
        %v284 = vpop.permute.xlu0 %283
        %vm285 = vcmp.ge.s32.totalorder %v270, 1
        %v286 = vsel %vm285, %v284, 0.0
        %v287 = vadd.f32 %v277, %v286
        %288 = vrot.lane.b32.xlu0 %v287, 2
        %v289 = vpop.permute.xlu0 %288
        %vm290 = vcmp.ge.s32.totalorder %v270, 2
        %v291 = vsel %vm290, %v289, 0.0
        %v292 = vadd.f32 %v287, %v291
        %293 = vrot.lane.b32.xlu0 %v292, 4
        %v294 = vpop.permute.xlu0 %293
        %vm295 = vcmp.ge.s32.totalorder %v270, 4
        %v296 = vsel %vm295, %v294, 0.0
        %v297 = vadd.f32 %v292, %v296
        %298 = vrot.lane.b32.xlu0 %v297, 8
        %v299 = vpop.permute.xlu0 %298
        %vm300 = vcmp.ge.s32.totalorder %v270, 8
        %v301 = vsel %vm300, %v299, 0.0
        %v302 = vadd.f32 %v297, %v301
        %303 = vrot.lane.b32.xlu0 %v302, 16
        %v304 = vpop.permute.xlu0 %303
        %vm305 = vcmp.ge.s32.totalorder %v270, 16
        %v306 = vsel %vm305, %v304, 0.0
        %v307 = vadd.f32 %v302, %v306
        %308 = vrot.lane.b32.xlu0 %v307, 32
        %v309 = vpop.permute.xlu0 %308
        %vm310 = vcmp.ge.s32.totalorder %v270, 32
        %v311 = vsel %vm310, %v309, 0.0
        %v312 = vadd.f32 %v307, %v311
        %313 = vrot.lane.b32.xlu0 %v312, 64
        %v314 = vpop.permute.xlu0 %313
        %vm315 = vcmp.ge.s32.totalorder %v270, 64
        %v316 = vsel %vm315, %v314, 0.0
        %v317 = vadd.f32 %v312, %v316
        %319 = vset.pattern.permute.xlu0 0
        %320 = vperm.xlu0 %319, %v278
        %v321 = vpop.permute.xlu0 %320
        %v323 = vadd.f32 %v317, %v321
        %v324 = vadd.f32 %v278, %v282
        %vm325 = vcmask 1024
        %326 = vst.msk [vmem:[#allocation2] sm:$0x3] %vm325, %v324
        %v327 = vld [vmem:[%s244] sm:$0x1]
        %v328 = vmul.f32 %v323, %v327
        %v329 = vmul.f32 %v328, 2.0
        %v330 = vmul.f32 %v329, %v323
        %v332 = vrot.slane %v330, 7
        %v334 = vsub.f32 %v323, %v332
        %v336 = vlaneseq
        %v337 = vshrl.u32 %v336, 7
        %v338 = vsub.s32 0, %v337
        %v339 = vrot.slane %v327, %v338
        %v341 = vmul.f32 %v334, %v339
        %v342 = vmul.f32 %v328, %v328
        %v344 = vrot.slane %v342, 7
        %v346 = vadd.f32 %v341, %v344
        %v347 = vadd.f32 %v346, 1e-08
        %v348 = vrsqrt.pop %v347
        %v349 = vlaneseq
        %v350 = vshrl.u32 %v349, 7
        %v351 = vsub.s32 0, %v350
        %v352 = vrot.slane %v328, %v351
        %v353 = vsub.f32 %v251, %v352
        %v354 = vlaneseq
        %v355 = vshrl.u32 %v354, 7
        %v356 = vsub.s32 1, %v355
        %v357 = vrot.slane %v348, %v356
        %v358 = vmul.f32 %v353, %v357
        %v359 = vld [vmem:[%s1] sm:$0xff]
        %361 = vset.pattern.permute.xlu0 0
        %362 = vperm.xlu0 %361, %v359
        %v363 = vpop.permute.xlu0 %362
        %v365 = vmul.f32 %v358, %v363
        %v366 = vld [vmem:[%s2] sm:$0xff]
        %368 = vset.pattern.permute.xlu0 0
        %369 = vperm.xlu0 %368, %v366
        %v370 = vpop.permute.xlu0 %369
        %v372 = vadd.f32 %v365, %v370
        %373 = vst [vmem:[%s241] sm:$0xff] %v372
        %s374 = sand.u32 %s139, 1
        %s375 = scalar_lea.sflag [#allocation5], %s374
        %s376 = sand.u32 %s139, 1
        %s377 = smul.addr %s376, 8
        %s378 = scalar_lea.vmem [#allocation6], %s377
        // Predicated region
        $region45: #{tpu_custom_call.1} parent=35 // pred_check
          %p379 = pneg %p149
        $region46: #{tpu_custom_call.1} parent=35 // pred_check_branch
          %381 = sbr.rel (%p379) target = $region48
        $region47: #{tpu_custom_call.1} parent=35 // pred_region
          %s383 = ssub.s32 128, 128
          %384 = vsyncadd %s375, %s383
          %s385 = smul.addr %s25, 2
          %s386 = sadd.s32 %s26, %s385
          %s387 = smul.addr %s386, 128
          %s388 = scalar_lea.hbm %s4, %s387
          %s390 = sshll.u32 %s378, 4
          %s391 = int_to_ptr.vmem [resolvable:$true] %s390
          %393 = dma.vmem_to_hbm [thread:$0]  %s391, 128, %s388, %s375
        $region48: #{tpu_custom_call.1} parent=35 // pred_fallthru
          _
      $region36: #{tpu_custom_call.1} parent=5 // pred_fallthru
        _
      %p394 = scmp.le.s32.totalorder 2, %s16
      // Predicated region
      $region49: #{tpu_custom_call.1} parent=5 // pred_check
        %p395 = pneg %p394
      $region50: #{tpu_custom_call.1} parent=5 // pred_check_branch
        %397 = sbr.rel (%p395) target = $region52
      $region51: #{tpu_custom_call.1} parent=5 // pred_region
        %s398 = ssub.s32 %s16, 2
        // Predicated region
        $region53: #{tpu_custom_call.1} parent=51 // pred_check
          %p399 = pneg %p155
        $region54: #{tpu_custom_call.1} parent=51 // pred_check_branch
          %401 = sbr.rel (%p399) target = $region56
        $region55: #{tpu_custom_call.1} parent=51 // pred_region
          %s402 = sand.u32 %s140, 1
          %s403 = scalar_lea.sflag [#allocation5], %s402
          %s404 = sand.u32 %s140, 1
          %s405 = smul.addr %s404, 8
          %s406 = scalar_lea.vmem [#allocation6], %s405
          %407 = dma.done %s403, 128
        $region56: #{tpu_custom_call.1} parent=51 // pred_fallthru
          _
      $region52: #{tpu_custom_call.1} parent=5 // pred_fallthru
        _
    $region6: #{tpu_custom_call.1} parent=1 // loop_footer
      %s20 = sadd.s32 1, %s16
    $region7: #{tpu_custom_call.1} parent=1 // loop_footer_branch
      %15 = sbr.rel target = $region3
    $region8: #{tpu_custom_call.1} parent=1 // loop_exit
      _
    %408 = vsyncpa [#allocation4], 1
    %s409 = scalar_lea.sflag [#allocation4], 1
    %410 = vsyncpa %s409, 1
    %411 = vsyncpa [#allocation5], 1
    %s412 = scalar_lea.sflag [#allocation5], 1
    %413 = vsyncpa %s412, 1

</llo_original>
